<compile_context>
chip_gen: v7x
topology: tpu7x:2x2x1
jax: 0.10.0
libtpu: 0.0.40
codegen_flags: <defaults>
</compile_context>

<pallas_src>
import functools

import jax
import jax.numpy as jnp
from jax import lax
from jax.experimental import pallas as pl
from jax.experimental.pallas import tpu as pltpu

LANE = 128   # lane width (last-dim tile)
SUB = 8      # sublane width (second-to-last-dim tile)


def _round_up(v, m):
    return (v + m - 1) // m * m


# ----------------------------- in-kernel helpers -----------------------------

def _softplus(x):
    # matches torch.nn.functional.softplus (beta=1); numerically stable
    return jnp.maximum(x, 0.0) + jnp.log1p(jnp.exp(-jnp.abs(x)))


def _linear_f32(x_ref, w_ref, b_ref):
    # bf16 (or f32) operands, f32 accumulation on the MXU; bias added in f32.
    return jnp.dot(x_ref[...], w_ref[...],
                   preferred_element_type=jnp.float32) + b_ref[...]


def _row_rnorm(mu):
    # 1 / max(||mu||, 1e-12)  (== torch F.normalize clamp) via EUP rsqrt
    return lax.rsqrt(jnp.maximum(jnp.sum(mu * mu, axis=1, keepdims=True),
                                 1e-24))


# --------------------------------- kernels -----------------------------------

def _normal_kernel(x_ref, w_ref, b_ref, mean_ref, std_ref, *, dpad, eps):
    feats = _linear_f32(x_ref, w_ref, b_ref)            # [TB, 2*dpad]
    mean_ref[...] = feats[:, :dpad]                      # lane-aligned slice
    std_ref[...] = _softplus(feats[:, dpad:]) + eps


def _normal_single_scale_kernel(x_ref, w_ref, b_ref, mean_ref, std_ref,
                                *, dpad, eps):
    feats = _linear_f32(x_ref, w_ref, b_ref)             # [TB, dpad + 128]
    mu = feats[:, :dpad]
    mean_ref[...] = mu * _row_rnorm(mu)
    # the scale lives in column `dpad` of the padded slab; the whole 128-lane
    # slab is computed/stored (lane-dense vst), the wrapper keeps column 0.
    std_ref[...] = _softplus(feats[:, dpad:]) + eps


def _directional_kernel(x_ref, w_ref, b_ref, mu_ref, kappa_ref,
                        *, dpad, const, eps):
    # shared head for 'powerspherical' and 'vonMisesFisher'
    feats = _linear_f32(x_ref, w_ref, b_ref)             # [TB, dpad + 128]
    mu = feats[:, :dpad]
    mu_ref[...] = mu * _row_rnorm(mu)
    kappa_ref[...] = const * _softplus(feats[:, dpad:]) + eps


def _sphere_kernel(x_ref, w_ref, b_ref, mu_ref, norm_ref):
    mu = _linear_f32(x_ref, w_ref, b_ref)                # [TB, dpad]
    sumsq = jnp.sum(mu * mu, axis=1, keepdims=True)
    # no eps clamp: matches torch mu / ||mu|| (zero row -> NaN)
    mu_ref[...] = mu * lax.rsqrt(sumsq)
    norm_ref[...] = jnp.broadcast_to(jnp.sqrt(sumsq), norm_ref.shape)


def _sphere_nofc_kernel(x_ref, mu_ref, norm_ref):
    mu = x_ref[...].astype(jnp.float32)
    sumsq = jnp.sum(mu * mu, axis=1, keepdims=True)
    mu_ref[...] = mu * lax.rsqrt(sumsq)
    norm_ref[...] = jnp.broadcast_to(jnp.sqrt(sumsq), norm_ref.shape)


# --------------------------------- wrapper -----------------------------------

class ProbabilisticLayerPallas:
    """JAX/Pallas port of Probabilistic_Layer. Returns distribution params."""

    def __init__(self, distribution: str = 'powerspherical',
                 in_features: int = 128, use_bias: bool = True,
                 eps: float = 1e-4, key=None,
                 compute_dtype=jnp.bfloat16, block_rows: int = 256):
        self.dim = in_features
        self.distribution = distribution
        self.eps = float(eps)
        self.compute_dtype = compute_dtype
        self.block_rows = int(block_rows)

        D = in_features
        self.dpad = _round_up(D, LANE)

        if 'powerspherical' in distribution:
            out_features = D + 1
        elif distribution == 'normal':
            out_features = D * 2
        elif distribution in ('vonMisesFisher', 'normalSingleScale'):
            out_features = D + 1
        else:
            out_features = D
        self.out_features = out_features

        # lane-aligned padded column layout
        if distribution == 'normal':
            self.out_pad = 2 * self.dpad          # mean [0,dpad), logvar [dpad,2dpad)
        elif out_features == D + 1:
            self.out_pad = self.dpad + LANE       # mu [0,dpad), scale at col dpad
        else:
            self.out_pad = self.dpad

        if distribution != 'sphereNoFC':
            key = jax.random.PRNGKey(0) if key is None else key
            kw, kb = jax.random.split(key)
            bound = 1.0 / (D ** 0.5)              # same scale as nn.Linear init
            w = jax.random.uniform(kw, (D, out_features), jnp.float32,
                                   -bound, bound)
            if use_bias:
                b = jax.random.uniform(kb, (out_features,), jnp.float32,
                                       -bound, bound)
            else:
                b = jnp.zeros((out_features,), jnp.float32)
            # keep unpadded f32 copies for parity tests
            self.weight_ref = w
            self.bias_ref = b

            W = jnp.zeros((D, self.out_pad), jnp.float32)
            bv = jnp.zeros((self.out_pad,), jnp.float32)
            if distribution == 'normal':
                W = W.at[:, :D].set(w[:, :D]) \
                     .at[:, self.dpad:self.dpad + D].set(w[:, D:])
                bv = bv.at[:D].set(b[:D]) \
                       .at[self.dpad:self.dpad + D].set(b[D:])
            elif out_features == D + 1:
                W = W.at[:, :D].set(w[:, :D]).at[:, self.dpad].set(w[:, D])
                bv = bv.at[:D].set(b[:D]).at[self.dpad].set(b[D])
            else:
                W = W.at[:, :D].set(w)
                bv = bv.at[:D].set(b)
            # store at compute dtype (bf16 halves HBM traffic); bias stays f32
            self.weight = W.astype(compute_dtype)
            self.bias = bv.reshape(1, self.out_pad)
        else:
            self.weight = None
            self.bias = None
            self.weight_ref = None
            self.bias_ref = None

    # -- batch-tiled pallas_call for the Linear-backed heads --
    def _call_linear(self, kernel, x, out_widths):
        B, D = x.shape
        tb = min(self.block_rows, _round_up(B, SUB))
        b_pad = _round_up(B, tb)
        xp = x.astype(self.compute_dtype)
        if b_pad != B:
            xp = jnp.pad(xp, ((0, b_pad - B), (0, 0)))
        grid = (b_pad // tb,)

        in_specs = [
            pl.BlockSpec((tb, D), lambda i: (i, 0)),                 # x tile
            pl.BlockSpec((D, self.out_pad), lambda i: (0, 0)),       # W resident
            pl.BlockSpec((1, self.out_pad), lambda i: (0, 0)),       # b resident
        ]
        out_specs = tuple(pl.BlockSpec((tb, w), lambda i: (i, 0))
                          for w in out_widths)
        out_shape = tuple(jax.ShapeDtypeStruct((b_pad, w), jnp.float32)
                          for w in out_widths)

        outs = pl.pallas_call(
            kernel,
            grid=grid,
            in_specs=in_specs,
            out_specs=out_specs,
            out_shape=out_shape,
            compiler_params=pltpu.CompilerParams(
                dimension_semantics=("parallel",)),   # v7x megacore sharding
        )(xp, self.weight, self.bias)
        return tuple(o[:B] for o in outs)

    # -- batch-tiled pallas_call for sphereNoFC (no Linear) --
    def _call_nofc(self, x):
        B, D = x.shape
        tb = min(self.block_rows, _round_up(B, SUB))
        b_pad = _round_up(B, tb)
        xp = x.astype(jnp.float32)
        pad_r, pad_c = b_pad - B, self.dpad - D
        if pad_r or pad_c:
            xp = jnp.pad(xp, ((0, pad_r), (0, pad_c)))
        grid = (b_pad // tb,)

        mu, norm = pl.pallas_call(
            _sphere_nofc_kernel,
            grid=grid,
            in_specs=[pl.BlockSpec((tb, self.dpad), lambda i: (i, 0))],
            out_specs=(pl.BlockSpec((tb, self.dpad), lambda i: (i, 0)),
                       pl.BlockSpec((tb, LANE), lambda i: (i, 0))),
            out_shape=(jax.ShapeDtypeStruct((b_pad, self.dpad), jnp.float32),
                       jax.ShapeDtypeStruct((b_pad, LANE), jnp.float32)),
            compiler_params=pltpu.CompilerParams(
                dimension_semantics=("parallel",)),
        )(xp)
        return mu[:B, :D], norm[:B, 0]

    def __call__(self, x):
        B, D = x.shape
        assert D == self.dim
        dist = self.distribution
        dpad, eps = self.dpad, self.eps

        if dist == 'normal':
            mean, std = self._call_linear(
                functools.partial(_normal_kernel, dpad=dpad, eps=eps),
                x, (dpad, dpad))
            return mean[:, :D], std[:, :D]                 # Normal(mean, std)

        if dist == 'normalSingleScale':
            mean, std = self._call_linear(
                functools.partial(_normal_single_scale_kernel,
                                  dpad=dpad, eps=eps),
                x, (dpad, LANE))
            # expand the single scale column to [B, D] (matches .expand)
            return mean[:, :D], jnp.broadcast_to(std[:, :1], (B, D))

        if dist == 'sphere':
            mu, norm = self._call_linear(_sphere_kernel, x, (dpad, LANE))
            return mu[:, :D], norm[:, 0]                   # PointDistribution

        if dist == 'sphereNoFC':
            return self._call_nofc(x)                      # PointDistribution

        if dist == 'vonMisesFisher' or 'powerspherical' in dist:
            const = float(self.dim) ** 0.5
            mu, kappa = self._call_linear(
                functools.partial(_directional_kernel,
                                  dpad=dpad, const=const, eps=eps),
                x, (dpad, LANE))
            return mu[:, :D], kappa[:, 0]                  # PowerSpherical / vMF

        # TODO(synk): distribution 'none' has no defined forward (PyTorch raises).
        raise ValueError('Forward pass with unknown distribution.')


# ----------------------------------- main ------------------------------------

if __name__ == "__main__":
    key = jax.random.PRNGKey(0)
    kx, kp, kx2 = jax.random.split(key, 3)

    # --- parity check 1: powerspherical head, f32 compute, multi-tile grid ---
    B, D = 64, 128
    x = jax.random.normal(kx, (B, D), jnp.float32)
    layer = ProbabilisticLayerPallas('powerspherical', in_features=D, key=kp,
                                     compute_dtype=jnp.float32, block_rows=32)
    mu, kappa = layer(x)
    jax.block_until_ready((mu, kappa))

    feats = x @ layer.weight_ref + layer.bias_ref
    mu_part = feats[:, :D]
    mu_ref = mu_part / jnp.maximum(
        jnp.linalg.norm(mu_part, axis=1, keepdims=True), 1e-12)
    kappa_ref = (D ** 0.5) * jax.nn.softplus(feats[:, -1]) + layer.eps
    assert jnp.allclose(mu, mu_ref, atol=1e-5), "mu mismatch"
    assert jnp.allclose(kappa, kappa_ref, atol=1e-4, rtol=1e-5), "kappa mismatch"

    # --- parity check 2: non-128-multiple features + ragged batch (padding path)
    B2, D2 = 22, 96
    x2 = jax.random.normal(kx2, (B2, D2), jnp.float32)
    layer2 = ProbabilisticLayerPallas('powerspherical', in_features=D2, key=kp,
                                      compute_dtype=jnp.float32)
    mu2, kappa2 = layer2(x2)
    jax.block_until_ready((mu2, kappa2))
    feats2 = x2 @ layer2.weight_ref + layer2.bias_ref
    mu2_part = feats2[:, :D2]
    mu2_ref = mu2_part / jnp.maximum(
        jnp.linalg.norm(mu2_part, axis=1, keepdims=True), 1e-12)
    kappa2_ref = (D2 ** 0.5) * jax.nn.softplus(feats2[:, -1]) + layer2.eps
    assert jnp.allclose(mu2, mu2_ref, atol=1e-5), "padded mu mismatch"
    assert jnp.allclose(kappa2, kappa2_ref, atol=1e-4, rtol=1e-5), \
        "padded kappa mismatch"

    # --- exercise the remaining heads on the default bf16-MXU fast path ---
    for dist in ('normal', 'normalSingleScale', 'sphere', 'sphereNoFC',
                 'vonMisesFisher'):
        l = ProbabilisticLayerPallas(dist, in_features=D, key=kp)
        out = l(x)
        jax.block_until_ready(out)

    # bf16 fast path sanity: mu rows remain unit-norm within bf16 rounding
    layer_bf16 = ProbabilisticLayerPallas('powerspherical', in_features=D, key=kp)
    mu_b, kappa_b = layer_bf16(x)
    jax.block_until_ready((mu_b, kappa_b))
    assert jnp.allclose(jnp.sum(mu_b * mu_b, axis=1), 1.0, atol=1e-2), \
        "bf16 mu not unit-norm"

    print("KERNEL_OK")
</pallas_src>

<mosaic_0001>
module attributes {stable_mosaic.version = 11 : i64} {
  func.func @_directional_kernel(%arg0: i32, %arg1: memref<32x128xf32, #tpu.memory_space<vmem>>, %arg2: memref<128x256xf32, #tpu.memory_space<vmem>>, %arg3: memref<1x256xf32, #tpu.memory_space<vmem>>, %arg4: memref<32x128xf32, #tpu.memory_space<vmem>>, %arg5: memref<32x128xf32, #tpu.memory_space<vmem>>) attributes {dimension_semantics = [#tpu.dimension_semantics<parallel>], iteration_bounds = array<i64: 2>, scalar_prefetch = 0 : i64, scratch_operands = 0 : i64, tpu.core_type = #tpu.core_type<tc>, window_params = [{transform_indices = @transform_0, window_bounds = array<i64: 32, 128>}, {pipeline_mode = #tpu.pipeline_mode<synchronous>, transform_indices = @transform_1, window_bounds = array<i64: 128, 256>}, {pipeline_mode = #tpu.pipeline_mode<synchronous>, transform_indices = @transform_2, window_bounds = array<i64: 1, 256>}, {transform_indices = @transform_3, window_bounds = array<i64: 32, 128>}, {transform_indices = @transform_4, window_bounds = array<i64: 32, 128>}]} {
    %c0 = arith.constant 0 : index
    %c0_0 = arith.constant 0 : index
    %0 = vector.load %arg1[%c0, %c0_0] : memref<32x128xf32, #tpu.memory_space<vmem>>, vector<32x128xf32>
    %c0_1 = arith.constant 0 : index
    %c0_2 = arith.constant 0 : index
    %1 = vector.load %arg2[%c0_1, %c0_2] : memref<128x256xf32, #tpu.memory_space<vmem>>, vector<128x256xf32>
    %cst = arith.constant dense<0.000000e+00> : vector<32x256xf32>
    %2 = tpu.matmul %0, %1, %cst {dimension_numbers = #tpu.dot_dimension_numbers<[1], [0], [0], [1], [0, 0, 1, 1], [], []>} : vector<32x128xf32>, vector<128x256xf32>, vector<32x256xf32> -> vector<32x256xf32>
    %c0_3 = arith.constant 0 : index
    %c0_4 = arith.constant 0 : index
    %3 = vector.load %arg3[%c0_3, %c0_4] : memref<1x256xf32, #tpu.memory_space<vmem>>, vector<1x256xf32>
    %4 = vector.broadcast %3 : vector<1x256xf32> to vector<32x256xf32>
    %5 = arith.addf %2, %4 : vector<32x256xf32>
    %6 = vector.extract_strided_slice %5 {offsets = [0, 0], sizes = [32, 128], strides = [1, 1]} : vector<32x256xf32> to vector<32x128xf32>
    %7 = arith.mulf %6, %6 : vector<32x128xf32>
    %cst_5 = arith.constant dense<0.000000e+00> : vector<32xf32>
    %8 = vector.multi_reduction <add>, %7, %cst_5 [1] : vector<32x128xf32> to vector<32xf32>
    %9 = vector.shape_cast %8 : vector<32xf32> to vector<32x1xf32>
    %cst_6 = arith.constant 1.000000e-24 : f32
    %10 = vector.broadcast %cst_6 : f32 to vector<32x1xf32>
    %11 = arith.maximumf %9, %10 : vector<32x1xf32>
    %12 = math.rsqrt %11 : vector<32x1xf32>
    %13 = vector.broadcast %12 : vector<32x1xf32> to vector<32x128xf32>
    %14 = arith.mulf %6, %13 : vector<32x128xf32>
    %c0_7 = arith.constant 0 : index
    %c0_8 = arith.constant 0 : index
    %15 = vector.load %arg4[%c0_7, %c0_8] : memref<32x128xf32, #tpu.memory_space<vmem>>, vector<32x128xf32>
    tpu.vector_store %arg4[%c0_7, %c0_8], %14 {strides = array<i32>} : memref<32x128xf32, #tpu.memory_space<vmem>>, vector<32x128xf32>,
    %16 = vector.extract_strided_slice %5 {offsets = [0, 128], sizes = [32, 128], strides = [1, 1]} : vector<32x256xf32> to vector<32x128xf32>
    %cst_9 = arith.constant 0.000000e+00 : f32
    %17 = vector.broadcast %cst_9 : f32 to vector<32x128xf32>
    %18 = arith.maximumf %16, %17 : vector<32x128xf32>
    %19 = math.absf %16 : vector<32x128xf32>
    %cst_10 = arith.constant 0.000000e+00 : f32
    %20 = vector.broadcast %cst_10 : f32 to vector<32x128xf32>
    %21 = arith.subf %20, %19 : vector<32x128xf32>
    %22 = math.exp %21 : vector<32x128xf32>
    %23 = math.log1p %22 : vector<32x128xf32>
    %24 = arith.addf %18, %23 : vector<32x128xf32>
    %cst_11 = arith.constant 11.3137083 : f32
    %25 = vector.broadcast %cst_11 : f32 to vector<32x128xf32>
    %26 = arith.mulf %25, %24 : vector<32x128xf32>
    %cst_12 = arith.constant 9.99999974E-5 : f32
    %27 = vector.broadcast %cst_12 : f32 to vector<32x128xf32>
    %28 = arith.addf %26, %27 : vector<32x128xf32>
    %c0_13 = arith.constant 0 : index
    %c0_14 = arith.constant 0 : index
    %29 = vector.load %arg5[%c0_13, %c0_14] : memref<32x128xf32, #tpu.memory_space<vmem>>, vector<32x128xf32>
    tpu.vector_store %arg5[%c0_13, %c0_14], %28 {strides = array<i32>} : memref<32x128xf32, #tpu.memory_space<vmem>>, vector<32x128xf32>,
    return
  }
  func.func @transform_0(%arg0: i32) -> (i32, i32) {
    %c0_i32 = arith.constant 0 : i32
    %c0_i32_0 = arith.constant 0 : i32
    return %arg0, %c0_i32 : i32, i32
  }
  func.func @transform_1(%arg0: i32) -> (i32, i32) {
    %c0_i32 = arith.constant 0 : i32
    %c0_i32_0 = arith.constant 0 : i32
    %c0_i32_1 = arith.constant 0 : i32
    return %c0_i32, %c0_i32_0 : i32, i32
  }
  func.func @transform_2(%arg0: i32) -> (i32, i32) {
    %c0_i32 = arith.constant 0 : i32
    %c0_i32_0 = arith.constant 0 : i32
    %c0_i32_1 = arith.constant 0 : i32
    return %c0_i32, %c0_i32_0 : i32, i32
  }
  func.func @transform_3(%arg0: i32) -> (i32, i32) {
    %c0_i32 = arith.constant 0 : i32
    %c0_i32_0 = arith.constant 0 : i32
    return %arg0, %c0_i32 : i32, i32
  }
  func.func @transform_4(%arg0: i32) -> (i32, i32) {
    %c0_i32 = arith.constant 0 : i32
    %c0_i32_0 = arith.constant 0 : i32
    return %arg0, %c0_i32 : i32, i32
  }
}

</mosaic_0001>

<llo_original>
// kernel: tpu_custom_call.1
$region0: #{tpu_custom_call.1}
  #allocation0 [shape = 'u32[]', space=smem, size = 0x4, offset = 0x4, fixed_abs, tag = 'smem constant byte address 0x4 - core index']
  #allocation1 [shape = 'u32[144,128]{1,0:T(1,128)}', space=vmem, size = 0x12000, scoped, tag = 'internal scratch']
  %s0 = inlined_call_operand.hbm [shape: f32[64,128], index: 0, kind: input, shape index: {}]
  %s1 = inlined_call_operand.hbm [shape: f32[128,256], index: 1, kind: input, shape index: {}]
  %s2 = inlined_call_operand.vmem [shape: f32[1,256], index: 2, kind: input, shape index: {}]
  %s3 = inlined_call_operand.hbm [shape: f32[64,128], index: 3, kind: output, shape index: {0}]
  %s4 = inlined_call_operand.hbm [shape: f32[64,128], index: 4, kind: output, shape index: {1}]
  %5 = xla_tuple %s3, %s4
  %s6 = sld [smem:[#allocation0]]
  $region61: #{tpu_custom_call.1} parent=0
    _
  %s8 = ssub.s32 1, %s6
  %s9 = scalar_select 0, %s8, %s6
  $region1: #{tpu_custom_call.1} parent=0
    #allocation2 [shape = 'u8[32768]{0}', space=vmem, size = 0x8000, scoped, tag = 'input window, operand 0']
    #allocation3 [shape = 's32[2]{0}', space=sflag, size = 0x8, scoped, tag = 'scoped memory for tpu_custom_call.1']
    #allocation4 [shape = 's32[2]{0}', space=sflag, size = 0x8, scoped, tag = 'scoped memory for tpu_custom_call.1']
    #allocation5 [shape = 'u8[131072]{0}', space=vmem, size = 0x20000, scoped, tag = 'input window, operand 1, single buffered']
    #allocation6 [shape = 's32[1]{0}', space=sflag, size = 0x4, scoped, tag = 'scoped memory for tpu_custom_call.1']
    #allocation7 [shape = 'u8[32768]{0}', space=vmem, size = 0x8000, scoped, tag = 'output window, operand 0']
    #allocation8 [shape = 'u8[32768]{0}', space=vmem, size = 0x8000, scoped, tag = 'output window, operand 1']
    #allocation9 [shape = 's32[2]{0}', space=sflag, size = 0x8, scoped, tag = 'scoped memory for tpu_custom_call.1']
    %10 = vsyncpa [#allocation3], 0
    %s11 = scalar_lea.sflag [#allocation3], 1
    %12 = vsyncpa %s11, 0
    %13 = vsyncpa [#allocation6], 0
    %14 = vsyncpa [#allocation4], 0
    %s15 = scalar_lea.sflag [#allocation4], 1
    %16 = vsyncpa %s15, 0
    %17 = vsyncpa [#allocation9], 0
    %s18 = scalar_lea.sflag [#allocation9], 1
    %19 = vsyncpa %s18, 0
    loop: start=0, step=1, limit=4
    $region2: #{tpu_custom_call.1} parent=1 // loop_pre_header
      _
    $region3: #{tpu_custom_call.1} parent=1 // loop_header
      %s21 = sphi 0, %s25
      %p22 = scmp.ge.s32.totalorder %s21, 4
      %s31 = sphi 0, %s33
      %s34 = sphi 0, %s31
      %s35 = sphi 0, %s34
      %s51 = sphi 0, %s35
      %s55 = sphi 0, %s55
      %s57 = sphi 0, %s55
      %s58 = sphi 0, %s57
      %s72 = sphi 0, %s58
      %s76 = sphi 0, %s76
      %s78 = sphi 0, %s76
      %s79 = sphi 0, %s78
      %s93 = sphi 0, %s79
      %s99 = sphi 0, %s101
      %s102 = sphi 0, %s99
      %s103 = sphi 0, %s102
      %s119 = sphi 0, %s103
      %s125 = sphi 0, %s127
      %s128 = sphi 0, %s125
      %s129 = sphi 0, %s128
      %s145 = sphi 0, %s129
    $region4: #{tpu_custom_call.1} parent=1 // loop_header_branch
      %24 = sbr.rel (%p22) target = $region8
    $region5: #{tpu_custom_call.1} parent=1 // loop_body
      %s26 = ssub.s32 %s21, 1
      %s27 = ssub.s32 %s21, 2
      %s28 = sadd.s32 %s21, 1
      %s29 = ssub.s32 %s21, %s28
      %p30 = scmp.eq.s32.totalorder %s29, 0
      %s32 = sadd.s32 %s31, 1
      %s33 = scalar_select %p30, %s31, %s32
      %p36 = pneg %p30
      %p37 = scmp.eq.s32.totalorder %s21, 1
      %p38 = por %p36, %p37
      %p39 = scmp.ne.s32.totalorder %s31, %s34
      %p40 = scmp.eq.s32.totalorder %s21, 0
      %p41 = por %p39, %p40
      %p42 = scmp.ne.s32.totalorder %s31, %s34
      %p43 = scmp.eq.s32.totalorder %s26, 1
      %p44 = por %p42, %p43
      %p45 = scmp.ne.s32.totalorder %s34, %s35
      %p46 = scmp.eq.s32.totalorder %s26, 0
      %p47 = por %p45, %p46
      %p48 = scmp.ne.s32.totalorder %s34, %s35
      %p49 = scmp.eq.s32.totalorder %s27, 1
      %p50 = por %p48, %p49
      %p52 = scmp.ne.s32.totalorder %s35, %s51
      %p53 = scmp.eq.s32.totalorder %s27, 0
      %p54 = por %p52, %p53
      %s56 = sadd.s32 %s55, 1
      %p59 = scmp.eq.s32.totalorder %s21, 1
      %p60 = scmp.ne.s32.totalorder %s55, %s57
      %p61 = scmp.eq.s32.totalorder %s21, 0
      %p62 = por %p60, %p61
      %p63 = scmp.ne.s32.totalorder %s55, %s57
      %p64 = scmp.eq.s32.totalorder %s26, 1
      %p65 = por %p63, %p64
      %p66 = scmp.ne.s32.totalorder %s57, %s58
      %p67 = scmp.eq.s32.totalorder %s26, 0
      %p68 = por %p66, %p67
      %p69 = scmp.ne.s32.totalorder %s57, %s58
      %p70 = scmp.eq.s32.totalorder %s27, 1
      %p71 = por %p69, %p70
      %p73 = scmp.ne.s32.totalorder %s58, %s72
      %p74 = scmp.eq.s32.totalorder %s27, 0
      %p75 = por %p73, %p74
      %s77 = sadd.s32 %s76, 1
      %p80 = scmp.eq.s32.totalorder %s21, 1
      %p81 = scmp.ne.s32.totalorder %s76, %s78
      %p82 = scmp.eq.s32.totalorder %s21, 0
      %p83 = por %p81, %p82
      %p84 = scmp.ne.s32.totalorder %s76, %s78
      %p85 = scmp.eq.s32.totalorder %s26, 1
      %p86 = por %p84, %p85
      %p87 = scmp.ne.s32.totalorder %s78, %s79
      %p88 = scmp.eq.s32.totalorder %s26, 0
      %p89 = por %p87, %p88
      %p90 = scmp.ne.s32.totalorder %s78, %s79
      %p91 = scmp.eq.s32.totalorder %s27, 1
      %p92 = por %p90, %p91
      %p94 = scmp.ne.s32.totalorder %s79, %s93
      %p95 = scmp.eq.s32.totalorder %s27, 0
      %p96 = por %p94, %p95
      %s97 = ssub.s32 %s21, %s28
      %p98 = scmp.eq.s32.totalorder %s97, 0
      %s100 = sadd.s32 %s99, 1
      %s101 = scalar_select %p98, %s99, %s100
      %p104 = pneg %p98
      %p105 = scmp.eq.s32.totalorder %s21, 1
      %p106 = por %p104, %p105
      %p107 = scmp.ne.s32.totalorder %s99, %s102
      %p108 = scmp.eq.s32.totalorder %s21, 0
      %p109 = por %p107, %p108
      %p110 = scmp.ne.s32.totalorder %s99, %s102
      %p111 = scmp.eq.s32.totalorder %s26, 1
      %p112 = por %p110, %p111
      %p113 = scmp.ne.s32.totalorder %s102, %s103
      %p114 = scmp.eq.s32.totalorder %s26, 0
      %p115 = por %p113, %p114
      %p116 = scmp.ne.s32.totalorder %s102, %s103
      %p117 = scmp.eq.s32.totalorder %s27, 1
      %p118 = por %p116, %p117
      %p120 = scmp.ne.s32.totalorder %s103, %s119
      %p121 = scmp.eq.s32.totalorder %s27, 0
      %p122 = por %p120, %p121
      %s123 = ssub.s32 %s21, %s28
      %p124 = scmp.eq.s32.totalorder %s123, 0
      %s126 = sadd.s32 %s125, 1
      %s127 = scalar_select %p124, %s125, %s126
      %p130 = pneg %p124
      %p131 = scmp.eq.s32.totalorder %s21, 1
      %p132 = por %p130, %p131
      %p133 = scmp.ne.s32.totalorder %s125, %s128
      %p134 = scmp.eq.s32.totalorder %s21, 0
      %p135 = por %p133, %p134
      %p136 = scmp.ne.s32.totalorder %s125, %s128
      %p137 = scmp.eq.s32.totalorder %s26, 1
      %p138 = por %p136, %p137
      %p139 = scmp.ne.s32.totalorder %s128, %s129
      %p140 = scmp.eq.s32.totalorder %s26, 0
      %p141 = por %p139, %p140
      %p142 = scmp.ne.s32.totalorder %s128, %s129
      %p143 = scmp.eq.s32.totalorder %s27, 1
      %p144 = por %p142, %p143
      %p146 = scmp.ne.s32.totalorder %s129, %s145
      %p147 = scmp.eq.s32.totalorder %s27, 0
      %p148 = por %p146, %p147
      %p149 = scmp.le.s32.totalorder 1, %s21
      %p150 = scmp.lt.s32.totalorder %s21, 3
      %p151 = pnand %p149, %p150
      %p152 = pneg %p151
      // Predicated region
      $region9: #{tpu_custom_call.1} parent=5 // pred_check
        _
      $region10: #{tpu_custom_call.1} parent=5 // pred_check_branch
        %154 = sbr.rel (%p151) target = $region12
      $region11: #{tpu_custom_call.1} parent=5 // pred_region
        %s155 = ssub.s32 %s21, 1
        // Predicated region
        $region13: #{tpu_custom_call.1} parent=11 // pred_check
          %p156 = pneg %p68
        $region14: #{tpu_custom_call.1} parent=11 // pred_check_branch
          %158 = sbr.rel (%p156) target = $region16
        $region15: #{tpu_custom_call.1} parent=11 // pred_region
          %s160 = ssub.s32 4096, 4096
          %161 = vsyncadd [#allocation6], %s160
          %s162 = sshll.u32 [#allocation5], 4
          %s163 = int_to_ptr.vmem [resolvable:$true] %s162
          %168 = dma.hbm_to_vmem [thread:$0]  %s1, 4096, %s163, [#allocation6], 256, 256, 16
        $region16: #{tpu_custom_call.1} parent=11 // pred_fallthru
          _
        // Predicated region
        $region17: #{tpu_custom_call.1} parent=11 // pred_check
          %p169 = pneg %p89
        $region18: #{tpu_custom_call.1} parent=11 // pred_check_branch
          %171 = sbr.rel (%p169) target = $region20
        $region19: #{tpu_custom_call.1} parent=11 // pred_region
          _
        $region20: #{tpu_custom_call.1} parent=11 // pred_fallthru
          _
      $region12: #{tpu_custom_call.1} parent=5 // pred_fallthru
        _
      %p172 = scmp.lt.s32.totalorder %s21, 2
      // Predicated region
      $region21: #{tpu_custom_call.1} parent=5 // pred_check
        %p173 = pneg %p172
      $region22: #{tpu_custom_call.1} parent=5 // pred_check_branch
        %175 = sbr.rel (%p173) target = $region24
      $region23: #{tpu_custom_call.1} parent=5 // pred_region
        // Predicated region
        $region25: #{tpu_custom_call.1} parent=23 // pred_check
          %p176 = pneg %p41
        $region26: #{tpu_custom_call.1} parent=23 // pred_check_branch
          %178 = sbr.rel (%p176) target = $region28
        $region27: #{tpu_custom_call.1} parent=23 // pred_region
          %s179 = sand.u32 %s31, 1
          %s180 = scalar_lea.sflag [#allocation3], %s179
          %s181 = sand.u32 %s31, 1
          %s182 = smul.addr %s181, 32
          %s183 = scalar_lea.vmem [#allocation2], %s182
          %s184 = smul.u32 4, %s21
          %s186 = ssub.s32 512, 512
          %187 = vsyncadd %s180, %s186
          %s188 = smul.addr %s184, 128
          %s189 = scalar_lea.hbm %s0, %s188
          %s190 = sshll.u32 %s183, 4
          %s191 = int_to_ptr.vmem [resolvable:$true] %s190
          %196 = dma.hbm_to_vmem [thread:$0]  %s189, 512, %s191, %s180, 128, 128, 8
        $region28: #{tpu_custom_call.1} parent=23 // pred_fallthru
          _
      $region24: #{tpu_custom_call.1} parent=5 // pred_fallthru
        _
      %p197 = scmp.le.s32.totalorder 1, %s21
      %p198 = scmp.lt.s32.totalorder %s21, 3
      %p199 = pnand %p197, %p198
      %p200 = pneg %p199
      // Predicated region
      $region29: #{tpu_custom_call.1} parent=5 // pred_check
        _
      $region30: #{tpu_custom_call.1} parent=5 // pred_check_branch
        %202 = sbr.rel (%p199) target = $region32
      $region31: #{tpu_custom_call.1} parent=5 // pred_region
        %s203 = ssub.s32 %s21, 1
        %s204 = sand.u32 %s34, 1
        %s205 = scalar_lea.sflag [#allocation3], %s204
        %s206 = sand.u32 %s34, 1
        %s207 = smul.addr %s206, 32
        %s208 = scalar_lea.vmem [#allocation2], %s207
        // Predicated region
        $region33: #{tpu_custom_call.1} parent=31 // pred_check
          %p209 = pneg %p47
        $region34: #{tpu_custom_call.1} parent=31 // pred_check_branch
          %211 = sbr.rel (%p209) target = $region36
        $region35: #{tpu_custom_call.1} parent=31 // pred_region
          %212 = dma.done %s205, 512
        $region36: #{tpu_custom_call.1} parent=31 // pred_fallthru
          _
        // Predicated region
        $region37: #{tpu_custom_call.1} parent=31 // pred_check
          %p213 = pneg %p68
        $region38: #{tpu_custom_call.1} parent=31 // pred_check_branch
          %215 = sbr.rel (%p213) target = $region40
        $region39: #{tpu_custom_call.1} parent=31 // pred_region
          %216 = dma.done [#allocation6], 4096
        $region40: #{tpu_custom_call.1} parent=31 // pred_fallthru
          _
        %s217 = sand.u32 %s34, 1
        %s218 = scalar_lea.sflag [#allocation3], %s217
        %s219 = sand.u32 %s34, 1
        %s220 = smul.addr %s219, 32
        %s221 = scalar_lea.vmem [#allocation2], %s220
        %p222 = pneg %p47
        %p223 = pneg %p44
        %p224 = pneg %p68
        %p225 = pneg %p65
        %p226 = pneg %p89
        %p227 = pneg %p86
        %p228 = pneg %p115
        %p229 = pneg %p112
        %s230 = sand.u32 %s102, 1
        %s231 = scalar_lea.sflag [#allocation4], %s230
        %s232 = sand.u32 %s102, 1
        %s233 = smul.addr %s232, 32
        %s234 = scalar_lea.vmem [#allocation7], %s233
        %p235 = pneg %p141
        %p236 = pneg %p138
        %s237 = sand.u32 %s128, 1
        %s238 = scalar_lea.sflag [#allocation9], %s237
        %s239 = sand.u32 %s128, 1
        %s240 = smul.addr %s239, 32
        %s241 = scalar_lea.vmem [#allocation8], %s240
        %s242 = smul.u32 4, %s26
        %s243 = smul.u32 4, %s26
        %s244 = smul.u32 4, %s26
        %v245 = vld [vmem:[%s208] sm:$0xff]
        %v246 = vld [vmem:[%s208 + $0x8] sm:$0xff]
        %v247 = vld [vmem:[%s208 + $0x10] sm:$0xff]
        %v248 = vld [vmem:[%s208 + $0x18] sm:$0xff]
        %v249 = vld [vmem:[#allocation5] sm:$0xff]
        %v250 = vld [vmem:[#allocation5 + $0x8] sm:$0xff]
        %v251 = vld [vmem:[#allocation5 + $0x10] sm:$0xff]
        %v252 = vld [vmem:[#allocation5 + $0x18] sm:$0xff]
        %v253 = vld [vmem:[#allocation5 + $0x20] sm:$0xff]
        %v254 = vld [vmem:[#allocation5 + $0x28] sm:$0xff]
        %v255 = vld [vmem:[#allocation5 + $0x30] sm:$0xff]
        %v256 = vld [vmem:[#allocation5 + $0x38] sm:$0xff]
        %v257 = vld [vmem:[#allocation5 + $0x40] sm:$0xff]
        %v258 = vld [vmem:[#allocation5 + $0x48] sm:$0xff]
        %v259 = vld [vmem:[#allocation5 + $0x50] sm:$0xff]
        %v260 = vld [vmem:[#allocation5 + $0x58] sm:$0xff]
        %v261 = vld [vmem:[#allocation5 + $0x60] sm:$0xff]
        %v262 = vld [vmem:[#allocation5 + $0x68] sm:$0xff]
        %v263 = vld [vmem:[#allocation5 + $0x70] sm:$0xff]
        %v264 = vld [vmem:[#allocation5 + $0x78] sm:$0xff]
        %v265 = vld [vmem:[#allocation5 + $0x80] sm:$0xff]
        %v266 = vld [vmem:[#allocation5 + $0x88] sm:$0xff]
        %v267 = vld [vmem:[#allocation5 + $0x90] sm:$0xff]
        %v268 = vld [vmem:[#allocation5 + $0x98] sm:$0xff]
        %v269 = vld [vmem:[#allocation5 + $0xa0] sm:$0xff]
        %v270 = vld [vmem:[#allocation5 + $0xa8] sm:$0xff]
        %v271 = vld [vmem:[#allocation5 + $0xb0] sm:$0xff]
        %v272 = vld [vmem:[#allocation5 + $0xb8] sm:$0xff]
        %v273 = vld [vmem:[#allocation5 + $0xc0] sm:$0xff]
        %v274 = vld [vmem:[#allocation5 + $0xc8] sm:$0xff]
        %v275 = vld [vmem:[#allocation5 + $0xd0] sm:$0xff]
        %v276 = vld [vmem:[#allocation5 + $0xd8] sm:$0xff]
        %v277 = vld [vmem:[#allocation5 + $0xe0] sm:$0xff]
        %v278 = vld [vmem:[#allocation5 + $0xe8] sm:$0xff]
        %v279 = vld [vmem:[#allocation5 + $0xf0] sm:$0xff]
        %v280 = vld [vmem:[#allocation5 + $0xf8] sm:$0xff]
        %v281 = vld [vmem:[%s2] sm:$0x3]
        %v283 = vlaneseq
        %v284 = vshrl.u32 %v283, 7
        %v285 = vsub.s32 0, %v284
        %v286 = vrot.slane %v281, %v285
        %v287 = vlaneseq
        %v288 = vshrl.u32 %v287, 7
        %v289 = vsub.s32 1, %v288
        %v290 = vrot.slane %v281, %v289
        %293 = vmatprep.subr.mxu0 %v250
        %294 = vmatpush1.msra.mxu0 %v249
        %295 = vmatprep.subr.mxu0 %v252
        %296 = vmatpush1.msra.mxu0 %v251
        %297 = vmatprep.subr.mxu0 %v254
        %298 = vmatpush1.msra.mxu0 %v253
        %299 = vmatprep.subr.mxu0 %v256
        %300 = vmatpush1.msra.mxu0 %v255
        %301 = vmatprep.subr.mxu0 %v258
        %302 = vmatpush1.msra.mxu0 %v257
        %303 = vmatprep.subr.mxu0 %v260
        %304 = vmatpush1.msra.mxu0 %v259
        %305 = vmatprep.subr.mxu0 %v262
        %306 = vmatpush1.msra.mxu0 %v261
        %307 = vmatprep.subr.mxu0 %v264
        %308 = vmatpush1.msra.mxu0 %v263
        %309 = vmatprep.subr.mxu0 %v266
        %310 = vmatpush1.msra.mxu0 %v265
        %311 = vmatprep.subr.mxu0 %v268
        %312 = vmatpush1.msra.mxu0 %v267
        %313 = vmatprep.subr.mxu0 %v270
        %314 = vmatpush1.msra.mxu0 %v269
        %315 = vmatprep.subr.mxu0 %v272
        %316 = vmatpush1.msra.mxu0 %v271
        %317 = vmatprep.subr.mxu0 %v274
        %318 = vmatpush1.msra.mxu0 %v273
        %319 = vmatprep.subr.mxu0 %v276
        %320 = vmatpush1.msra.mxu0 %v275
        %321 = vmatprep.subr.mxu0 %v278
        %322 = vmatpush1.msra.mxu0 %v277
        %323 = vmatprep.subr.mxu0 %v280
        %324 = vmatpush1.msra.mxu0 %v279
        %325 = vmatprep.subr.mxu0 0.0
        %326 = vmatpush1.msra.mxu0 0.0
        %327 = vmatprep.subr.mxu0 0.0
        %328 = vmatpush1.msra.mxu0 0.0
        %329 = vmatprep.subr.mxu0 0.0
        %330 = vmatpush1.msra.mxu0 0.0
        %331 = vmatprep.subr.mxu0 0.0
        %332 = vmatpush1.msra.mxu0 0.0
        %333 = vmatprep.subr.mxu0 0.0
        %334 = vmatpush1.msra.mxu0 0.0
        %335 = vmatprep.subr.mxu0 0.0
        %336 = vmatpush1.msra.mxu0 0.0
        %337 = vmatprep.subr.mxu0 0.0
        %338 = vmatpush1.msra.mxu0 0.0
        %339 = vmatprep.subr.mxu0 0.0
        %340 = vmatpush1.msra.mxu0 0.0
        %341 = vmatprep.subr.mxu0 0.0
        %342 = vmatpush1.msra.mxu0 0.0
        %343 = vmatprep.subr.mxu0 0.0
        %344 = vmatpush1.msra.mxu0 0.0
        %345 = vmatprep.subr.mxu0 0.0
        %346 = vmatpush1.msra.mxu0 0.0
        %347 = vmatprep.subr.mxu0 0.0
        %348 = vmatpush1.msra.mxu0 0.0
        %349 = vmatprep.subr.mxu0 0.0
        %350 = vmatpush1.msra.mxu0 0.0
        %351 = vmatprep.subr.mxu0 0.0
        %352 = vmatpush1.msra.mxu0 0.0
        %353 = vmatprep.subr.mxu0 0.0
        %354 = vmatpush1.msra.mxu0 0.0
        %355 = vmatprep.subr.mxu0 0.0
        %356 = vmatpush1.msra.mxu0 0.0
        %357 = vmatprep.mubr.f32.mxu0 0.0
        %358 = vmatmul.mubr.f32.gmra.mrb[0].mxu0 %v245
        %v359 = vpop.f32.mrb[0].mxu0
        %v360 = vadd.f32 %v286, %v359
        %v361 = vpop.f32.mrb[0].mxu0
        %v362 = vadd.f32 %v290, %v361
        %363 = vmatprep.mubr.f32.mxu0 0.0
        %364 = vmatmul.mubr.f32.gmra.mrb[0].mxu0 %v246
        %v365 = vpop.f32.mrb[0].mxu0
        %v366 = vadd.f32 %v286, %v365
        %v367 = vpop.f32.mrb[0].mxu0
        %v368 = vadd.f32 %v290, %v367
        %369 = vmatprep.mubr.f32.mxu0 0.0
        %370 = vmatmul.mubr.f32.gmra.mrb[0].mxu0 %v247
        %v371 = vpop.f32.mrb[0].mxu0
        %v372 = vadd.f32 %v286, %v371
        %v373 = vpop.f32.mrb[0].mxu0
        %v374 = vadd.f32 %v290, %v373
        %375 = vmatprep.mubr.f32.mxu0 0.0
        %376 = vmatmul.mubr.f32.gmra.mrb[0].mxu0 %v248
        %v377 = vpop.f32.mrb[0].mxu0
        %v378 = vadd.f32 %v286, %v377
        %v379 = vpop.f32.mrb[0].mxu0
        %v380 = vadd.f32 %v290, %v379
        %381 = vdwg.mxu0
        %v382 = vmul.f32 %v360, %v360
        %v383 = vmul.f32 %v366, %v366
        %v384 = vmul.f32 %v372, %v372
        %v385 = vmul.f32 %v378, %v378
        %386 = vadd.xlane.f32.xlu0 %v382
        %v387 = vpop.xlane.xlu0 %386
        %388 = vadd.xlane.f32.xlu0 %v383
        %v389 = vpop.xlane.xlu0 %388
        %390 = vadd.xlane.f32.xlu0 %v384
        %v391 = vpop.xlane.xlu0 %390
        %392 = vadd.xlane.f32.xlu0 %v385
        %v393 = vpop.xlane.xlu0 %392
        %v394 = vmax.f32 %v387, 1e-24
        %v395 = vmax.f32 %v389, 1e-24
        %v396 = vmax.f32 %v391, 1e-24
        %v397 = vmax.f32 %v393, 1e-24
        %v398 = vrsqrt.pop %v394
        %v399 = vrsqrt.pop %v395
        %v400 = vrsqrt.pop %v396
        %v401 = vrsqrt.pop %v397
        %v402 = vmul.f32 %v360, %v398
        %v403 = vmul.f32 %v366, %v399
        %v404 = vmul.f32 %v372, %v400
        %v405 = vmul.f32 %v378, %v401
        %406 = vst [vmem:[%s234] sm:$0xff] %v402
        %407 = vst [vmem:[%s234 + $0x8] sm:$0xff] %v403
        %408 = vst [vmem:[%s234 + $0x10] sm:$0xff] %v404
        %409 = vst [vmem:[%s234 + $0x18] sm:$0xff] %v405
        %v410 = vmax.f32 %v362, 0.0
        %v411 = vmax.f32 %v368, 0.0
        %v412 = vmax.f32 %v374, 0.0
        %v413 = vmax.f32 %v380, 0.0
        %v414 = vand.u32 2147483647, %v362
        %v415 = vand.u32 2147483647, %v368
        %v416 = vand.u32 2147483647, %v374
        %v417 = vand.u32 2147483647, %v380
        %v418 = vsub.f32 0.0, %v414
        %v419 = vsub.f32 0.0, %v415
        %v420 = vsub.f32 0.0, %v416
        %v421 = vsub.f32 0.0, %v417
        %v422 = vmul.f32 %v418, 1.442695
        %v423 = vpow.pop %v422
        %v424 = vmul.f32 %v419, 1.442695
        %v425 = vpow.pop %v424
        %v426 = vmul.f32 %v420, 1.442695
        %v427 = vpow.pop %v426
        %v428 = vmul.f32 %v421, 1.442695
        %v429 = vpow.pop %v428
        %v430 = vadd.f32 %v423, 1.0
        %v431 = vlog2.pop %v430
        %v432 = vmul.f32 %v431, 0.6931472
        %v433 = vmul.f32 -0.5, %v423
        %v434 = vadd.f32 %v433, 1.0
        %v435 = vmul.f32 %v434, %v423
        %v436 = vand.u32 2147483647, %v423
        %vm437 = vcmp.lt.f32.partialorder %v436, 0.0004427343
        %v438 = vsel %vm437, %v435, %v432
        %v439 = vadd.f32 %v425, 1.0
        %v440 = vlog2.pop %v439
        %v441 = vmul.f32 %v440, 0.6931472
        %v442 = vmul.f32 -0.5, %v425
        %v443 = vadd.f32 %v442, 1.0
        %v444 = vmul.f32 %v443, %v425
        %v445 = vand.u32 2147483647, %v425
        %vm446 = vcmp.lt.f32.partialorder %v445, 0.0004427343
        %v447 = vsel %vm446, %v444, %v441
        %v448 = vadd.f32 %v427, 1.0
        %v449 = vlog2.pop %v448
        %v450 = vmul.f32 %v449, 0.6931472
        %v451 = vmul.f32 -0.5, %v427
        %v452 = vadd.f32 %v451, 1.0
        %v453 = vmul.f32 %v452, %v427
        %v454 = vand.u32 2147483647, %v427
        %vm455 = vcmp.lt.f32.partialorder %v454, 0.0004427343
        %v456 = vsel %vm455, %v453, %v450
        %v457 = vadd.f32 %v429, 1.0
        %v458 = vlog2.pop %v457
        %v459 = vmul.f32 %v458, 0.6931472
        %v460 = vmul.f32 -0.5, %v429
        %v461 = vadd.f32 %v460, 1.0
        %v462 = vmul.f32 %v461, %v429
        %v463 = vand.u32 2147483647, %v429
        %vm464 = vcmp.lt.f32.partialorder %v463, 0.0004427343
        %v465 = vsel %vm464, %v462, %v459
        %v466 = vadd.f32 %v410, %v438
        %v467 = vadd.f32 %v411, %v447
        %v468 = vadd.f32 %v412, %v456
        %v469 = vadd.f32 %v413, %v465
        %v470 = vmul.f32 %v466, 11.313708
        %v471 = vmul.f32 %v467, 11.313708
        %v472 = vmul.f32 %v468, 11.313708
        %v473 = vmul.f32 %v469, 11.313708
        %v474 = vadd.f32 %v470, 0.0001
        %v475 = vadd.f32 %v471, 0.0001
        %v476 = vadd.f32 %v472, 0.0001
        %v477 = vadd.f32 %v473, 0.0001
        %478 = vst [vmem:[%s241] sm:$0xff] %v474
        %479 = vst [vmem:[%s241 + $0x8] sm:$0xff] %v475
        %480 = vst [vmem:[%s241 + $0x10] sm:$0xff] %v476
        %481 = vst [vmem:[%s241 + $0x18] sm:$0xff] %v477
        %s482 = sand.u32 %s102, 1
        %s483 = scalar_lea.sflag [#allocation4], %s482
        %s484 = sand.u32 %s102, 1
        %s485 = smul.addr %s484, 32
        %s486 = scalar_lea.vmem [#allocation7], %s485
        %s487 = sand.u32 %s128, 1
        %s488 = scalar_lea.sflag [#allocation9], %s487
        %s489 = sand.u32 %s128, 1
        %s490 = smul.addr %s489, 32
        %s491 = scalar_lea.vmem [#allocation8], %s490
        // Predicated region
        $region41: #{tpu_custom_call.1} parent=31 // pred_check
          %p492 = pneg %p112
        $region42: #{tpu_custom_call.1} parent=31 // pred_check_branch
          %494 = sbr.rel (%p492) target = $region44
        $region43: #{tpu_custom_call.1} parent=31 // pred_region
          %s495 = smul.u32 4, %s26
          %s497 = ssub.s32 512, 512
          %498 = vsyncadd %s483, %s497
          %s499 = smul.addr %s495, 128
          %s500 = scalar_lea.hbm %s3, %s499
          %s501 = sshll.u32 %s486, 4
          %s502 = int_to_ptr.vmem [resolvable:$true] %s501
          %507 = dma.vmem_to_hbm [thread:$0]  %s502, 512, %s500, %s483, 128, 128, 8
        $region44: #{tpu_custom_call.1} parent=31 // pred_fallthru
          _
        // Predicated region
        $region45: #{tpu_custom_call.1} parent=31 // pred_check
          %p508 = pneg %p138
        $region46: #{tpu_custom_call.1} parent=31 // pred_check_branch
          %510 = sbr.rel (%p508) target = $region48
        $region47: #{tpu_custom_call.1} parent=31 // pred_region
          %s511 = smul.u32 4, %s26
          %s513 = ssub.s32 512, 512
          %514 = vsyncadd %s488, %s513
          %s515 = smul.addr %s511, 128
          %s516 = scalar_lea.hbm %s4, %s515
          %s517 = sshll.u32 %s491, 4
          %s518 = int_to_ptr.vmem [resolvable:$true] %s517
          %523 = dma.vmem_to_hbm [thread:$0]  %s518, 512, %s516, %s488, 128, 128, 8
        $region48: #{tpu_custom_call.1} parent=31 // pred_fallthru
          _
      $region32: #{tpu_custom_call.1} parent=5 // pred_fallthru
        _
      %p524 = scmp.le.s32.totalorder 2, %s21
      // Predicated region
      $region49: #{tpu_custom_call.1} parent=5 // pred_check
        %p525 = pneg %p524
      $region50: #{tpu_custom_call.1} parent=5 // pred_check_branch
        %527 = sbr.rel (%p525) target = $region52
      $region51: #{tpu_custom_call.1} parent=5 // pred_region
        %s528 = ssub.s32 %s21, 2
        // Predicated region
        $region53: #{tpu_custom_call.1} parent=51 // pred_check
          %p529 = pneg %p118
        $region54: #{tpu_custom_call.1} parent=51 // pred_check_branch
          %531 = sbr.rel (%p529) target = $region56
        $region55: #{tpu_custom_call.1} parent=51 // pred_region
          %s532 = sand.u32 %s103, 1
          %s533 = scalar_lea.sflag [#allocation4], %s532
          %s534 = sand.u32 %s103, 1
          %s535 = smul.addr %s534, 32
          %s536 = scalar_lea.vmem [#allocation7], %s535
          %537 = dma.done %s533, 512
        $region56: #{tpu_custom_call.1} parent=51 // pred_fallthru
          _
        // Predicated region
        $region57: #{tpu_custom_call.1} parent=51 // pred_check
          %p538 = pneg %p144
        $region58: #{tpu_custom_call.1} parent=51 // pred_check_branch
          %540 = sbr.rel (%p538) target = $region60
        $region59: #{tpu_custom_call.1} parent=51 // pred_region
          %s541 = sand.u32 %s129, 1
          %s542 = scalar_lea.sflag [#allocation9], %s541
          %s543 = sand.u32 %s129, 1
          %s544 = smul.addr %s543, 32
          %s545 = scalar_lea.vmem [#allocation8], %s544
          %546 = dma.done %s542, 512
        $region60: #{tpu_custom_call.1} parent=51 // pred_fallthru
          _
      $region52: #{tpu_custom_call.1} parent=5 // pred_fallthru
        _
    $region6: #{tpu_custom_call.1} parent=1 // loop_footer
      %s25 = sadd.s32 1, %s21
    $region7: #{tpu_custom_call.1} parent=1 // loop_footer_branch
      %20 = sbr.rel target = $region3
    $region8: #{tpu_custom_call.1} parent=1 // loop_exit
      _
    %547 = vsyncpa [#allocation3], 1
    %s548 = scalar_lea.sflag [#allocation3], 1
    %549 = vsyncpa %s548, 1
    %550 = vsyncpa [#allocation6], 1
    %551 = vsyncpa [#allocation4], 1
    %s552 = scalar_lea.sflag [#allocation4], 1
    %553 = vsyncpa %s552, 1
    %554 = vsyncpa [#allocation9], 1
    %s555 = scalar_lea.sflag [#allocation9], 1
    %556 = vsyncpa %s555, 1

</llo_original>
